<compile_context>
chip_gen: v7x
topology: tpu7x:2x2x1
jax: 0.10.0
libtpu: 0.0.40
codegen_flags: <defaults>
</compile_context>

<pallas_src>
import math

import jax
import jax.numpy as jnp
from jax.experimental import pallas as pl
from jax.experimental.pallas import tpu as pltpu


def _round_up(v, m):
    return ((v + m - 1) // m) * m


def _sublane_align(dtype):
    # Packed sublane tile height: f32 -> 8, bf16 -> 16, int8/fp8 -> 32.
    return max(8, 32 // jnp.dtype(dtype).itemsize)


def _pick_tile(padded_dim, preferred, align=128):
    """Largest multiple of `align` <= preferred that evenly divides padded_dim.

    padded_dim is itself a multiple of `align`, so this always succeeds and
    guarantees no ragged blocks along that axis (mandatory for K)."""
    if padded_dim <= preferred:
        return padded_dim
    preferred = max(align, (preferred // align) * align)
    for cand in range(preferred, align - 1, -align):
        if padded_dim % cand == 0:
            return cand
    return align


def _tpu_defaults():
    """Generation-aware tile / VMEM defaults."""
    kind = ""
    try:
        kind = jax.devices()[0].device_kind.lower()
    except Exception:
        pass
    if "v5 lite" in kind or "v5e" in kind or "v5lite" in kind:
        # v5e: 197 TF/s bf16 / ~820 GB/s -> AI ~240 flop/B reached at 512x512.
        return dict(tm=512, tn=512, tk=512,
                    vmem_limit=32 * 1024 * 1024, two_tc=False)
    if "v7" in kind or "tpu7" in kind:
        # v7x: only 64 MiB VMEM per TC -> stay well under it; 2 TCs/chip.
        return dict(tm=1024, tn=1024, tk=512,
                    vmem_limit=48 * 1024 * 1024, two_tc=True)
    # v6e (and other big-VMEM chips / unknown): needs ~1024 tiles to be
    # compute-bound at 918 TF/s / 1.4 TB/s; ~20 MiB VMEM with double-buffers.
    return dict(tm=1024, tn=1024, tk=1024,
                vmem_limit=64 * 1024 * 1024, two_tc=False)


# ---------------------------------------------------------------------------
# Kernels
# ---------------------------------------------------------------------------
def _linear_kernel_kloop(x_ref, w_ref, b_ref, o_ref, acc_ref):
    """One (tm, tn) output tile; K is the innermost (reduction) grid axis."""
    k = pl.program_id(2)

    @pl.when(k == 0)
    def _init():
        acc_ref[...] = jnp.zeros_like(acc_ref)

    # Pure MXU matmul + f32 accumulate on the hot path.
    acc_ref[...] += jnp.dot(x_ref[...], w_ref[...],
                            preferred_element_type=jnp.float32)

    @pl.when(k == pl.num_programs(2) - 1)
    def _finalize():
        # Bias added exactly once per output tile (broadcast over tm rows).
        o_ref[...] = (acc_ref[...]
                      + b_ref[...].astype(jnp.float32)).astype(o_ref.dtype)


def _linear_kernel_single_k(x_ref, w_ref, b_ref, o_ref):
    """grid_K == 1 fast path: no f32 scratch accumulator round-trip."""
    acc = jnp.dot(x_ref[...], w_ref[...], preferred_element_type=jnp.float32)
    o_ref[...] = (acc + b_ref[...].astype(jnp.float32)).astype(o_ref.dtype)


# ---------------------------------------------------------------------------
# Wrapper
# ---------------------------------------------------------------------------
def linear_pln_forward(x, weight_t, bias, *, out_dim=None,
                       tm=None, tn=None, tk=None,
                       compute_dtype=jnp.bfloat16,
                       vmem_limit_bytes=None):
    """y = x @ weight_t + bias  (nn.Linear forward, W stored transposed).

    x:        [B, in_dim]                          (caller dtype preserved)
    weight_t: [in_dim(_pad), out_dim(_pad)]        kernel-native layout; ideally
              pre-padded & in compute dtype (see init_linear_params)
    bias:     [out_dim(_pad)]
    out_dim:  logical output width (defaults to weight_t.shape[1]).
    """
    M, K = x.shape
    Kw, Nw = weight_t.shape
    assert K <= Kw, f"in_dim mismatch: x has {K}, weight has {Kw}"
    N = int(out_dim) if out_dim is not None else Nw
    assert N <= Nw

    out_dtype = x.dtype          # capture BEFORE any compute-dtype cast
    cfg = _tpu_defaults()
    tn_explicit = tn is not None
    tm = tm or cfg["tm"]
    tn = tn or cfg["tn"]
    tk = tk or cfg["tk"]
    vmem_limit = vmem_limit_bytes or cfg["vmem_limit"]

    # bf16 (default) MXU inputs, f32 accumulation.  Guarded casts: a weight
    # from init_linear_params is already in the compute dtype -> no per-call
    # HBM pass over the weight.
    if compute_dtype is not None:
        if x.dtype != compute_dtype:
            x = x.astype(compute_dtype)
        if weight_t.dtype != compute_dtype:
            weight_t = weight_t.astype(compute_dtype)
    cdt = x.dtype
    m_align = _sublane_align(cdt)

    # Lane-pad weight / bias only if the caller did NOT pre-pad them
    # (init_linear_params does -> these are no-ops on the hot path).
    Kp = _round_up(Kw, 128)
    Np = _round_up(Nw, 128)
    if (Kp, Np) != (Kw, Nw):
        weight_t = jnp.pad(weight_t, ((0, Kp - Kw), (0, Np - Nw)))
    b2d = bias.reshape(1, -1)
    if b2d.shape[1] != Np:
        b2d = jnp.pad(b2d, ((0, 0), (0, Np - b2d.shape[1])))

    # Tile sizes.  tk/tn divide the lane-padded K/N (no ragged reduction
    # blocks); tm is packed-sublane aligned (16 rows for bf16).
    tk = _pick_tile(Kp, tk)
    tn = _pick_tile(Np, tn)
    tm = _round_up(min(tm, _round_up(M, m_align)), m_align)
    Mp = _round_up(M, tm)

    grid_m, grid_n, grid_k = Mp // tm, Np // tn, Kp // tk

    # v7x has 2 TensorCores: give each one at least one output tile.
    if cfg["two_tc"] and not tn_explicit and grid_m == 1 and grid_n == 1 \
            and Np >= 256:
        tn = _pick_tile(Np, max(128, (Np // 2) // 128 * 128))
        grid_n = Np // tn

    # x: zero-pad K (MANDATORY -- garbage in the reduction dim would corrupt
    # valid outputs) and M up to the tile grid (cheap; x << W).  Ragged M/N
    # edges of the OUTPUT are handled by Pallas masked partial stores.
    if (Mp, Kp) != (M, K):
        x = jnp.pad(x, ((0, Mp - M), (0, Kp - K)))

    itemsize_c = jnp.dtype(cdt).itemsize
    flops = 2 * M * K * N
    bytes_accessed = (Mp * Kp * itemsize_c * grid_n      # x streamed per N tile
                      + Kp * Np * itemsize_c * grid_m    # W streamed per M tile
                      + Np * jnp.dtype(b2d.dtype).itemsize
                      + M * N * jnp.dtype(out_dtype).itemsize)
    cost = pl.CostEstimate(flops=flops, transcendentals=0,
                           bytes_accessed=bytes_accessed)
    out_shape = jax.ShapeDtypeStruct((M, N), out_dtype)

    if grid_k == 1:
        return pl.pallas_call(
            _linear_kernel_single_k,
            out_shape=out_shape,
            grid_spec=pltpu.PrefetchScalarGridSpec(
                num_scalar_prefetch=0,
                grid=(grid_m, grid_n),
                in_specs=[
                    pl.BlockSpec((tm, tk), lambda i, j: (i, 0)),  # x tile
                    pl.BlockSpec((tk, tn), lambda i, j: (0, j)),  # W tile
                    pl.BlockSpec((1, tn), lambda i, j: (0, j)),   # bias tile
                ],
                out_specs=pl.BlockSpec((tm, tn), lambda i, j: (i, j)),
            ),
            compiler_params=pltpu.CompilerParams(
                dimension_semantics=("parallel", "parallel"),
                vmem_limit_bytes=vmem_limit,
            ),
            cost_estimate=cost,
        )(x, weight_t, b2d)

    return pl.pallas_call(
        _linear_kernel_kloop,
        out_shape=out_shape,
        grid_spec=pltpu.PrefetchScalarGridSpec(
            num_scalar_prefetch=0,
            grid=(grid_m, grid_n, grid_k),
            in_specs=[
                pl.BlockSpec((tm, tk), lambda i, j, k: (i, k)),   # x tile
                pl.BlockSpec((tk, tn), lambda i, j, k: (k, j)),   # W tile
                pl.BlockSpec((1, tn), lambda i, j, k: (0, j)),    # bias tile
            ],
            out_specs=pl.BlockSpec((tm, tn), lambda i, j, k: (i, j)),
            scratch_shapes=[pltpu.VMEM((tm, tn), jnp.float32)],
        ),
        compiler_params=pltpu.CompilerParams(
            dimension_semantics=("parallel", "parallel", "arbitrary"),
            vmem_limit_bytes=vmem_limit,
        ),
        cost_estimate=cost,
    )(x, weight_t, b2d)


def init_linear_params(key, in_dim, out_dim, *, param_dtype=jnp.bfloat16):
    """nn.Linear-style init (uniform weight/bias, bound 1/sqrt(fan_in)).

    The weight is stored ONCE in kernel-native [in_dim, out_dim] layout,
    zero-padded to lane (128) multiples, and cast to the compute dtype, so
    the forward pass pays no per-call transpose / pad / astype of the weight.
    The bias is lane-padded but kept in f32 (it is added in f32)."""
    kw, kb = jax.random.split(key)
    bound = 1.0 / math.sqrt(in_dim)
    w = jax.random.uniform(kw, (in_dim, out_dim), jnp.float32,
                           minval=-bound, maxval=bound)
    b = jax.random.uniform(kb, (out_dim,), jnp.float32,
                           minval=-bound, maxval=bound)
    Kp, Np = _round_up(in_dim, 128), _round_up(out_dim, 128)
    w = jnp.pad(w, ((0, Kp - in_dim), (0, Np - out_dim))).astype(param_dtype)
    b = jnp.pad(b, (0, Np - out_dim))
    return w, b


if __name__ == "__main__":
    key = jax.random.PRNGKey(0)
    k_x, k_p, k_x2, k_p2 = jax.random.split(key, 4)

    # --- Small shape consistent with LinearPLN (single-K fast path) --------
    batch, in_dim, out_dim = 8, 32, 16
    x = jax.random.normal(k_x, (batch, in_dim), jnp.float32)
    w_t, bias = init_linear_params(k_p, in_dim, out_dim)

    out = jax.block_until_ready(
        linear_pln_forward(x, w_t, bias, out_dim=out_dim))
    assert out.shape == (batch, out_dim)
    assert out.dtype == x.dtype                    # caller dtype preserved

    # Reference with the SAME (bf16) params / bf16-cast inputs, f32 accum.
    w_f32 = w_t[:in_dim, :out_dim].astype(jnp.float32)
    x_bf = x.astype(jnp.bfloat16).astype(jnp.float32)
    ref = jnp.dot(x_bf, w_f32,
                  precision=jax.lax.Precision.HIGHEST) + bias[:out_dim]
    err = float(jnp.max(jnp.abs(out - ref)))
    assert err < 1e-3, f"single-tile max err {err}"

    # --- Ragged multi-tile shape: exercises the K-reduction accumulator,
    #     pl.when init/finalize, bias-once, K zero-pad and masked M/N edges --
    b2, d_in2, d_out2 = 100, 300, 200
    x2 = jax.random.normal(k_x2, (b2, d_in2), jnp.float32)
    w2, bias2 = init_linear_params(k_p2, d_in2, d_out2)
    out2 = jax.block_until_ready(
        linear_pln_forward(x2, w2, bias2, out_dim=d_out2,
                           tm=64, tn=128, tk=128))
    assert out2.shape == (b2, d_out2)
    assert out2.dtype == x2.dtype

    w2_f32 = w2[:d_in2, :d_out2].astype(jnp.float32)
    x2_bf = x2.astype(jnp.bfloat16).astype(jnp.float32)
    ref2 = jnp.dot(x2_bf, w2_f32,
                   precision=jax.lax.Precision.HIGHEST) + bias2[:d_out2]
    err2 = float(jnp.max(jnp.abs(out2 - ref2)))
    assert err2 < 2e-3, f"multi-tile max err {err2}"

    print("KERNEL_OK")
</pallas_src>

<mosaic_0001>
module attributes {stable_mosaic.version = 11 : i64} {
  func.func @_linear_kernel_single_k(%arg0: i32, %arg1: i32, %arg2: memref<16x128xbf16, #tpu.memory_space<vmem>>, %arg3: memref<128x128xbf16, #tpu.memory_space<vmem>>, %arg4: memref<1x128xf32, #tpu.memory_space<vmem>>, %arg5: memref<16x128xf32, #tpu.memory_space<vmem>>) attributes {dimension_semantics = [#tpu.dimension_semantics<parallel>, #tpu.dimension_semantics<parallel>], iteration_bounds = array<i64: 1, 1>, scalar_prefetch = 0 : i64, scratch_operands = 0 : i64, tpu.core_type = #tpu.core_type<tc>, window_params = [{transform_indices = @transform_0, window_bounds = array<i64: 16, 128>}, {transform_indices = @transform_1, window_bounds = array<i64: 128, 128>}, {transform_indices = @transform_2, window_bounds = array<i64: 1, 128>}, {transform_indices = @transform_3, window_bounds = array<i64: 16, 128>}]} {
    %c0 = arith.constant 0 : index
    %c0_0 = arith.constant 0 : index
    %0 = vector.load %arg2[%c0, %c0_0] : memref<16x128xbf16, #tpu.memory_space<vmem>>, vector<16x128xbf16>
    %c0_1 = arith.constant 0 : index
    %c0_2 = arith.constant 0 : index
    %1 = vector.load %arg3[%c0_1, %c0_2] : memref<128x128xbf16, #tpu.memory_space<vmem>>, vector<128x128xbf16>
    %cst = arith.constant dense<0.000000e+00> : vector<16x128xf32>
    %2 = tpu.matmul %0, %1, %cst {dimension_numbers = #tpu.dot_dimension_numbers<[1], [0], [0], [1], [0, 0, 1, 1], [], []>} : vector<16x128xbf16>, vector<128x128xbf16>, vector<16x128xf32> -> vector<16x128xf32>
    %c0_3 = arith.constant 0 : index
    %c0_4 = arith.constant 0 : index
    %3 = vector.load %arg4[%c0_3, %c0_4] : memref<1x128xf32, #tpu.memory_space<vmem>>, vector<1x128xf32>
    %4 = vector.broadcast %3 : vector<1x128xf32> to vector<16x128xf32>
    %5 = arith.addf %2, %4 : vector<16x128xf32>
    %c0_5 = arith.constant 0 : index
    %c0_6 = arith.constant 0 : index
    %6 = vector.load %arg5[%c0_5, %c0_6] : memref<16x128xf32, #tpu.memory_space<vmem>>, vector<16x128xf32>
    tpu.vector_store %arg5[%c0_5, %c0_6], %5 {strides = array<i32>} : memref<16x128xf32, #tpu.memory_space<vmem>>, vector<16x128xf32>,
    return
  }
  func.func @transform_0(%arg0: i32, %arg1: i32) -> (i32, i32) {
    %c0_i32 = arith.constant 0 : i32
    %c0_i32_0 = arith.constant 0 : i32
    return %arg0, %c0_i32 : i32, i32
  }
  func.func @transform_1(%arg0: i32, %arg1: i32) -> (i32, i32) {
    %c0_i32 = arith.constant 0 : i32
    %c0_i32_0 = arith.constant 0 : i32
    return %c0_i32, %arg1 : i32, i32
  }
  func.func @transform_2(%arg0: i32, %arg1: i32) -> (i32, i32) {
    %c0_i32 = arith.constant 0 : i32
    %c0_i32_0 = arith.constant 0 : i32
    return %c0_i32, %arg1 : i32, i32
  }
  func.func @transform_3(%arg0: i32, %arg1: i32) -> (i32, i32) {
    %c0_i32 = arith.constant 0 : i32
    return %arg0, %arg1 : i32, i32
  }
}

</mosaic_0001>

<llo_original>
// kernel: tpu_custom_call.1
$region0: #{tpu_custom_call.1}
  #allocation0 [shape = 'u32[]', space=smem, size = 0x4, offset = 0x4, fixed_abs, tag = 'smem constant byte address 0x4 - core index']
  #allocation1 [shape = 'u32[144,128]{1,0:T(1,128)}', space=vmem, size = 0x12000, scoped, tag = 'internal scratch']
  %s0 = inlined_call_operand.hbm [shape: bf16[16,128], index: 0, kind: input, shape index: {}]
  %s1 = inlined_call_operand.hbm [shape: bf16[128,128], index: 1, kind: input, shape index: {}]
  %s2 = inlined_call_operand.hbm [shape: f32[1,128], index: 2, kind: input, shape index: {}]
  %s3 = inlined_call_operand.hbm [shape: f32[8,16], index: 3, kind: output, shape index: {}]
  %s4 = sld [smem:[#allocation0]]
  $region34: #{tpu_custom_call.1} parent=0
    _
  %s6 = ssub.s32 1, %s4
  %s7 = scalar_select 0, %s6, %s4
  $region1: #{tpu_custom_call.1} parent=0
    #allocation2 [shape = 'u8[4096]{0}', space=vmem, size = 0x1000, scoped, tag = 'input window, operand 0, single buffered']
    #allocation3 [shape = 's32[1]{0}', space=sflag, size = 0x4, scoped, tag = 'scoped memory for tpu_custom_call.1']
    #allocation4 [shape = 's32[1]{0}', space=sflag, size = 0x4, scoped, tag = 'scoped memory for tpu_custom_call.1']
    #allocation5 [shape = 'u8[32768]{0}', space=vmem, size = 0x8000, scoped, tag = 'input window, operand 1, single buffered']
    #allocation6 [shape = 's32[1]{0}', space=sflag, size = 0x4, scoped, tag = 'scoped memory for tpu_custom_call.1']
    #allocation7 [shape = 'u8[512]{0}', space=vmem, size = 0x400, scoped, tag = 'input window, operand 2, single buffered']
    #allocation8 [shape = 'u8[8192]{0}', space=vmem, size = 0x2000, scoped, tag = 'output window, operand 0, single buffered']
    %8 = vsyncpa [#allocation3], 0
    %9 = vsyncpa [#allocation6], 0
    %10 = vsyncpa [#allocation4], 0
    // Predicated region
    $region2: #{tpu_custom_call.1} parent=1 // pred_check
      _
    $region3: #{tpu_custom_call.1} parent=1 // pred_check_branch
      %12 = sbr.rel (0) target = $region5
    $region4: #{tpu_custom_call.1} parent=1 // pred_region
      %s14 = ssub.s32 128, 128
      %15 = vsyncadd [#allocation3], %s14
      %s16 = sshll.u32 [#allocation2], 4
      %s17 = int_to_ptr.vmem [resolvable:$true] %s16
      %22 = dma.hbm_to_vmem [thread:$0]  %s0, 128, %s17, [#allocation3], 64, 64, 4
    $region5: #{tpu_custom_call.1} parent=1 // pred_fallthru
      _
    // Predicated region
    $region6: #{tpu_custom_call.1} parent=1 // pred_check
      _
    $region7: #{tpu_custom_call.1} parent=1 // pred_check_branch
      %24 = sbr.rel (0) target = $region9
    $region8: #{tpu_custom_call.1} parent=1 // pred_region
      %s26 = ssub.s32 1024, 1024
      %27 = vsyncadd [#allocation6], %s26
      %s28 = sshll.u32 [#allocation5], 4
      %s29 = int_to_ptr.vmem [resolvable:$true] %s28
      %34 = dma.hbm_to_vmem [thread:$0]  %s1, 1024, %s29, [#allocation6], 64, 64, 4
    $region9: #{tpu_custom_call.1} parent=1 // pred_fallthru
      _
    // Predicated region
    $region10: #{tpu_custom_call.1} parent=1 // pred_check
      _
    $region11: #{tpu_custom_call.1} parent=1 // pred_check_branch
      %36 = sbr.rel (0) target = $region13
    $region12: #{tpu_custom_call.1} parent=1 // pred_region
      %s38 = ssub.s32 16, 16
      %39 = vsyncadd [#allocation6], %s38
      %s41 = sshll.u32 [#allocation7], 4
      %s42 = int_to_ptr.vmem [resolvable:$true] %s41
      %44 = dma.hbm_to_vmem [thread:$0]  %s2, 16, %s42, [#allocation6]
    $region13: #{tpu_custom_call.1} parent=1 // pred_fallthru
      _
    // Predicated region
    $region14: #{tpu_custom_call.1} parent=1 // pred_check
      _
    $region15: #{tpu_custom_call.1} parent=1 // pred_check_branch
      %46 = sbr.rel (0) target = $region17
    $region16: #{tpu_custom_call.1} parent=1 // pred_region
      %47 = dma.done [#allocation3], 128
    $region17: #{tpu_custom_call.1} parent=1 // pred_fallthru
      _
    // Predicated region
    $region18: #{tpu_custom_call.1} parent=1 // pred_check
      _
    $region19: #{tpu_custom_call.1} parent=1 // pred_check_branch
      %49 = sbr.rel (0) target = $region21
    $region20: #{tpu_custom_call.1} parent=1 // pred_region
      %50 = dma.done [#allocation6], 1024
    $region21: #{tpu_custom_call.1} parent=1 // pred_fallthru
      _
    // Predicated region
    $region22: #{tpu_custom_call.1} parent=1 // pred_check
      _
    $region23: #{tpu_custom_call.1} parent=1 // pred_check_branch
      %52 = sbr.rel (0) target = $region25
    $region24: #{tpu_custom_call.1} parent=1 // pred_region
      %53 = dma.done [#allocation6], 16
    $region25: #{tpu_custom_call.1} parent=1 // pred_fallthru
      _
    %v55 = vld [vmem:[#allocation2] sm:$0xf]
    %v56 = vld [vmem:[#allocation2 + $0x4] sm:$0xf]
    %v57 = vld [vmem:[#allocation5] sm:$0xf]
    %v58 = vld [vmem:[#allocation5 + $0x4] sm:$0xf]
    %v59 = vld [vmem:[#allocation5 + $0x8] sm:$0xf]
    %v60 = vld [vmem:[#allocation5 + $0xc] sm:$0xf]
    %v61 = vld [vmem:[#allocation5 + $0x10] sm:$0xf]
    %v62 = vld [vmem:[#allocation5 + $0x14] sm:$0xf]
    %v63 = vld [vmem:[#allocation5 + $0x18] sm:$0xf]
    %v64 = vld [vmem:[#allocation5 + $0x1c] sm:$0xf]
    %v65 = vld [vmem:[#allocation5 + $0x20] sm:$0xf]
    %v66 = vld [vmem:[#allocation5 + $0x24] sm:$0xf]
    %v67 = vld [vmem:[#allocation5 + $0x28] sm:$0xf]
    %v68 = vld [vmem:[#allocation5 + $0x2c] sm:$0xf]
    %v69 = vld [vmem:[#allocation5 + $0x30] sm:$0xf]
    %v70 = vld [vmem:[#allocation5 + $0x34] sm:$0xf]
    %v71 = vld [vmem:[#allocation5 + $0x38] sm:$0xf]
    %v72 = vld [vmem:[#allocation5 + $0x3c] sm:$0xf]
    %v73 = vld [vmem:[#allocation7] sm:$0x1]
    %v75 = vlaneseq
    %v76 = vshrl.u32 %v75, 7
    %v77 = vsub.s32 0, %v76
    %v78 = vrot.slane %v73, %v77
    %v82 = vunpack.c.l.b16 %v55
    %v83 = vunpack.c.l.b16 %v56
    %v84 = vpack.c.b16 %v83, %v82
    %v102 = vunpack.c.l.b16 %v57
    %v103 = vunpack.c.l.b16 %v58
    %v104 = vunpack.c.l.b16 %v59
    %v105 = vunpack.c.l.b16 %v60
    %v106 = vunpack.c.l.b16 %v61
    %v107 = vunpack.c.l.b16 %v62
    %v108 = vunpack.c.l.b16 %v63
    %v109 = vunpack.c.l.b16 %v64
    %v110 = vunpack.c.l.b16 %v65
    %v111 = vunpack.c.l.b16 %v66
    %v112 = vunpack.c.l.b16 %v67
    %v113 = vunpack.c.l.b16 %v68
    %v114 = vunpack.c.l.b16 %v69
    %v115 = vunpack.c.l.b16 %v70
    %v116 = vunpack.c.l.b16 %v71
    %v117 = vunpack.c.l.b16 %v72
    %v118 = vpack.c.b16 %v103, %v102
    %v119 = vpack.c.b16 %v105, %v104
    %v120 = vpack.c.b16 %v107, %v106
    %v121 = vpack.c.b16 %v109, %v108
    %v122 = vpack.c.b16 %v111, %v110
    %v123 = vpack.c.b16 %v113, %v112
    %v124 = vpack.c.b16 %v115, %v114
    %v125 = vpack.c.b16 %v117, %v116
    %134 = vmatprep.subr.bf16.mxu0 0
    %135 = vmatpush1.bf16.msra.mxu0 %v118
    %136 = vmatprep.subr.bf16.mxu0 0
    %137 = vmatpush1.bf16.msra.mxu0 %v119
    %138 = vmatprep.subr.bf16.mxu0 0
    %139 = vmatpush1.bf16.msra.mxu0 %v120
    %140 = vmatprep.subr.bf16.mxu0 0
    %141 = vmatpush1.bf16.msra.mxu0 %v121
    %142 = vmatprep.subr.bf16.mxu0 0
    %143 = vmatpush1.bf16.msra.mxu0 %v122
    %144 = vmatprep.subr.bf16.mxu0 0
    %145 = vmatpush1.bf16.msra.mxu0 %v123
    %146 = vmatprep.subr.bf16.mxu0 0
    %147 = vmatpush1.bf16.msra.mxu0 %v124
    %148 = vmatprep.subr.bf16.mxu0 0
    %149 = vmatpush1.bf16.msra.mxu0 %v125
    %150 = vmatprep.subr.bf16.mxu0 0
    %151 = vmatpush1.bf16.msra.mxu0 0
    %152 = vmatprep.subr.bf16.mxu0 0
    %153 = vmatpush1.bf16.msra.mxu0 0
    %154 = vmatprep.subr.bf16.mxu0 0
    %155 = vmatpush1.bf16.msra.mxu0 0
    %156 = vmatprep.subr.bf16.mxu0 0
    %157 = vmatpush1.bf16.msra.mxu0 0
    %158 = vmatprep.subr.bf16.mxu0 0
    %159 = vmatpush1.bf16.msra.mxu0 0
    %160 = vmatprep.subr.bf16.mxu0 0
    %161 = vmatpush1.bf16.msra.mxu0 0
    %162 = vmatprep.subr.bf16.mxu0 0
    %163 = vmatpush1.bf16.msra.mxu0 0
    %164 = vmatprep.subr.bf16.mxu0 0
    %165 = vmatpush1.bf16.msra.mxu0 0
    %166 = vmatprep.mubr.bf16.mxu0 0
    %167 = vmatmul.mubr.bf16.gmra.mrb[0].mxu0 %v84
    %v168 = vpop.f32.mrb[0].mxu0
    %v169 = vadd.f32 %v78, %v168
    %v170 = vpop.f32.mrb[0].mxu0
    %v171 = vpop.f32.mrb[0].mxu0
    %v172 = vadd.f32 %v78, %v171
    %v173 = vpop.f32.mrb[0].mxu0
    %174 = vdwg.mxu0
    %175 = vst [vmem:[#allocation8] sm:$0xff] %v169
    %176 = vst [vmem:[#allocation8 + $0x8] sm:$0xff] %v172
    // Predicated region
    $region26: #{tpu_custom_call.1} parent=1 // pred_check
      _
    $region27: #{tpu_custom_call.1} parent=1 // pred_check_branch
      %178 = sbr.rel (0) target = $region29
    $region28: #{tpu_custom_call.1} parent=1 // pred_region
      %s180 = ssub.s32 256, 128
      %181 = vsyncadd [#allocation4], %s180
      %s182 = sshll.u32 [#allocation8], 4
      %s183 = int_to_ptr.vmem [resolvable:$true] %s182
      %188 = dma.vmem_to_hbm [thread:$0]  %s183, 128, %s3, [#allocation4], 128, 128, 8
    $region29: #{tpu_custom_call.1} parent=1 // pred_fallthru
      _
    // Predicated region
    $region30: #{tpu_custom_call.1} parent=1 // pred_check
      _
    $region31: #{tpu_custom_call.1} parent=1 // pred_check_branch
      %190 = sbr.rel (0) target = $region33
    $region32: #{tpu_custom_call.1} parent=1 // pred_region
      %191 = dma.done [#allocation4], 256
    $region33: #{tpu_custom_call.1} parent=1 // pred_fallthru
      _
    %192 = vsyncpa [#allocation3], 1
    %193 = vsyncpa [#allocation6], 1
    %194 = vsyncpa [#allocation4], 1

</llo_original>
